<compile_context>
chip_gen: v7x
topology: tpu7x:2x2x1
jax: 0.10.0
libtpu: 0.0.40
codegen_flags: <defaults>
</compile_context>

<pallas_src>
import jax
import jax.numpy as jnp
from jax.experimental import pallas as pl
from jax.experimental.pallas import tpu as pltpu


def _round_up(x, m):
    return (x + m - 1) // m * m


# ----------------------------------------------------------------------------
# Fused branch math — shared by the Pallas kernel and the bf16 mirror reference
# ----------------------------------------------------------------------------
def _fused_math(vis, aud, txt, w1v, w1a, w1t, b1, w2, b2):
    """vis: (b, T, Dv) f32, aud: (b, Da) f32, txt: (b, Dt) f32.
    Weights bf16, biases f32; accumulation is f32 on the MXU.
    The 1/T of the temporal mean is folded into w1v."""
    v_sum = jnp.sum(vis, axis=1).astype(jnp.bfloat16)
    h = (jnp.dot(v_sum, w1v, preferred_element_type=jnp.float32)
         + jnp.dot(aud.astype(jnp.bfloat16), w1a,
                   preferred_element_type=jnp.float32)
         + jnp.dot(txt.astype(jnp.bfloat16), w1t,
                   preferred_element_type=jnp.float32)
         + b1)
    h = jnp.maximum(h, 0.0).astype(jnp.bfloat16)
    return jnp.dot(h, w2, preferred_element_type=jnp.float32) + b2


def _movieclip_kernel(vis_ref, aud_ref, txt_ref, w1v_ref, w1a_ref, w1t_ref,
                      b1_ref, w2_ref, b2_ref, out_ref):
    out_ref[...] = _fused_math(vis_ref[...], aud_ref[...], txt_ref[...],
                               w1v_ref[...], w1a_ref[...], w1t_ref[...],
                               b1_ref[...], w2_ref[...], b2_ref[...])


# ----------------------------------------------------------------------------
# Parameter folding / packing (wrapper glue; all heavy compute is in-kernel)
# ----------------------------------------------------------------------------
def fold_bn_into_linear(w, b, gamma, bn_beta, running_mean, running_var,
                        eps=1e-5):
    """Fold eval-mode BatchNorm1d into the preceding Linear.
    w: (in, out) already transposed, b: (out,).  x @ w_eff + b_eff == BN(x@w+b).
    """
    scale = gamma / jnp.sqrt(running_var + eps)
    return w * scale[None, :], (b - running_mean) * scale + bn_beta


def _prepare_fused(visual_features, audio_features, text_features, params):
    """Fold BN, 1/T mean-scale and alpha/beta into lane-dense bf16 weight
    slabs.  Activations are passed through untouched (f32)."""
    B, T, Dv = visual_features.shape
    Da = audio_features.shape[1]
    Dt = text_features.shape[1]
    H = params["wv1"].shape[1]
    C = params["wv2"].shape[1]
    f32, bf16 = jnp.float32, jnp.bfloat16

    wv1, bv1 = fold_bn_into_linear(params["wv1"], params["bv1"],
                                   params["v_bn_g"], params["v_bn_b"],
                                   params["v_bn_rm"], params["v_bn_rv"])
    wa1, ba1 = fold_bn_into_linear(params["wa1"], params["ba1"],
                                   params["a_bn_g"], params["a_bn_b"],
                                   params["a_bn_rm"], params["a_bn_rv"])
    wt1, bt1 = fold_bn_into_linear(params["wt1"], params["bt1"],
                                   params["t_bn_g"], params["t_bn_b"],
                                   params["t_bn_rm"], params["t_bn_rv"])
    wv1 = wv1 / T  # fold the 1/T of the temporal mean into the visual weight

    H3 = _round_up(3 * H, 128)  # lane-dense fused hidden width
    C4 = _round_up(4 * C, 128)  # lane-dense fused output width

    # Per-input W1 slabs, each placing its branch into its own hidden block.
    w1v = jnp.zeros((Dv, H3), f32).at[:, :H].set(wv1)
    w1a = jnp.zeros((Da, H3), f32).at[:, H:2 * H].set(wa1)
    w1t = jnp.zeros((Dt, H3), f32).at[:, 2 * H:3 * H].set(wt1)
    b1 = jnp.zeros((1, H3), f32)
    b1 = b1.at[0, :H].set(bv1).at[0, H:2 * H].set(ba1)
    b1 = b1.at[0, 2 * H:3 * H].set(bt1)

    alpha = params["alpha"].astype(f32)
    beta = params["beta"].astype(f32)
    gamma = 1.0 - alpha - beta

    wv2, bv2 = params["wv2"], params["bv2"]
    wa2, ba2 = params["wa2"], params["ba2"]
    wt2, bt2 = params["wt2"], params["bt2"]

    # Block-diagonal W2; 4th column block = alpha/beta-weighted multimodal fusion.
    w2 = jnp.zeros((H3, C4), f32)
    w2 = w2.at[:H, :C].set(wv2)
    w2 = w2.at[H:2 * H, C:2 * C].set(wa2)
    w2 = w2.at[2 * H:3 * H, 2 * C:3 * C].set(wt2)
    w2 = w2.at[:H, 3 * C:4 * C].set(alpha * wv2)
    w2 = w2.at[H:2 * H, 3 * C:4 * C].set(beta * wa2)
    w2 = w2.at[2 * H:3 * H, 3 * C:4 * C].set(gamma * wt2)
    b2 = jnp.zeros((1, C4), f32)
    b2 = b2.at[0, :C].set(bv2).at[0, C:2 * C].set(ba2)
    b2 = b2.at[0, 2 * C:3 * C].set(bt2)
    b2 = b2.at[0, 3 * C:4 * C].set(alpha * bv2 + beta * ba2 + gamma * bt2)

    return dict(w1v=w1v.astype(bf16), w1a=w1a.astype(bf16),
                w1t=w1t.astype(bf16), b1=b1,
                w2=w2.astype(bf16), b2=b2,
                dims=(B, T, Dv, Da, Dt, H3, C, C4))


# ----------------------------------------------------------------------------
# Forward
# ----------------------------------------------------------------------------
def movieclip_forward(visual_features, audio_features, text_features, params,
                      *, tile_b=128):
    p = _prepare_fused(visual_features, audio_features, text_features, params)
    B, T, Dv, Da, Dt, H3, C, C4 = p["dims"]

    # Pick TILE_B so the double-buffered f32 visual tile stays well under the
    # default scoped-VMEM limits (16 MiB v5e / 32 MiB v6e & v7x).
    vis_bytes_per_row = T * Dv * 4
    budget = 4 * 1024 * 1024  # per-buffer budget for the visual input
    max_rows = max(8, (budget // max(vis_bytes_per_row, 1)) // 8 * 8)
    TILE_B = max(8, min(tile_b, max_rows, _round_up(B, 8)))

    Bp = _round_up(B, TILE_B)
    vis = visual_features
    aud = audio_features
    txt = text_features
    if Bp != B:
        vis = jnp.pad(vis, ((0, Bp - B), (0, 0), (0, 0)))
        aud = jnp.pad(aud, ((0, Bp - B), (0, 0)))
        txt = jnp.pad(txt, ((0, Bp - B), (0, 0)))

    grid = (Bp // TILE_B,)

    cost = pl.CostEstimate(
        flops=2 * Bp * (Dv + Da + Dt) * H3 + 2 * Bp * H3 * C4,
        transcendentals=0,
        bytes_accessed=(vis.size * 4 + aud.size * 4 + txt.size * 4
                        + (Dv + Da + Dt) * H3 * 2 + H3 * C4 * 2
                        + (H3 + C4) * 4 + Bp * C4 * 4),
    )

    out = pl.pallas_call(
        _movieclip_kernel,
        out_shape=jax.ShapeDtypeStruct((Bp, C4), jnp.float32),
        grid_spec=pltpu.PrefetchScalarGridSpec(
            num_scalar_prefetch=0,
            grid=grid,
            in_specs=[
                pl.BlockSpec((TILE_B, T, Dv), lambda i: (i, 0, 0)),  # visual
                pl.BlockSpec((TILE_B, Da), lambda i: (i, 0)),        # audio
                pl.BlockSpec((TILE_B, Dt), lambda i: (i, 0)),        # text
                pl.BlockSpec((Dv, H3), lambda i: (0, 0)),            # W1 visual
                pl.BlockSpec((Da, H3), lambda i: (0, 0)),            # W1 audio
                pl.BlockSpec((Dt, H3), lambda i: (0, 0)),            # W1 text
                pl.BlockSpec((1, H3), lambda i: (0, 0)),             # b1
                pl.BlockSpec((H3, C4), lambda i: (0, 0)),            # W2
                pl.BlockSpec((1, C4), lambda i: (0, 0)),             # b2
            ],
            out_specs=pl.BlockSpec((TILE_B, C4), lambda i: (i, 0)),
        ),
        compiler_params=pltpu.CompilerParams(
            dimension_semantics=("parallel",)),
        cost_estimate=cost,
    )(vis, aud, txt, p["w1v"], p["w1a"], p["w1t"], p["b1"], p["w2"], p["b2"])

    out = out[:B]
    return {
        "visual_output": out[:, 0:C],
        "audio_output": out[:, C:2 * C],
        "text_output": out[:, 2 * C:3 * C],
        "multimodal_output": out[:, 3 * C:4 * C],
    }


# ----------------------------------------------------------------------------
# References
# ----------------------------------------------------------------------------
def mirror_reference(visual, audio, text, params):
    """Pure-JAX mirror of the exact fused bf16 math the kernel executes."""
    p = _prepare_fused(visual, audio, text, params)
    C = p["dims"][6]
    out = _fused_math(visual, audio, text, p["w1v"], p["w1a"], p["w1t"],
                      p["b1"], p["w2"], p["b2"])
    return out[:, :C], out[:, C:2 * C], out[:, 2 * C:3 * C], out[:, 3 * C:4 * C]


def reference_forward(visual, audio, text, params, eps=1e-5):
    """f32 reference with the original PyTorch eval-mode semantics."""
    def branch(x, w1, b1, g, bb, rm, rv, w2, b2):
        h = x @ w1 + b1
        h = (h - rm) * (g / jnp.sqrt(rv + eps)) + bb
        h = jnp.maximum(h, 0.0)
        return h @ w2 + b2

    v = jnp.mean(visual, axis=1)
    vo = branch(v, params["wv1"], params["bv1"], params["v_bn_g"],
                params["v_bn_b"], params["v_bn_rm"], params["v_bn_rv"],
                params["wv2"], params["bv2"])
    ao = branch(audio, params["wa1"], params["ba1"], params["a_bn_g"],
                params["a_bn_b"], params["a_bn_rm"], params["a_bn_rv"],
                params["wa2"], params["ba2"])
    to = branch(text, params["wt1"], params["bt1"], params["t_bn_g"],
                params["t_bn_b"], params["t_bn_rm"], params["t_bn_rv"],
                params["wt2"], params["bt2"])
    a, b = params["alpha"], params["beta"]
    mm = vo * a + ao * b + to * (1.0 - a - b)
    return vo, ao, to, mm


# ----------------------------------------------------------------------------
# Deterministic parameter init (shapes follow the module, scaled down)
# ----------------------------------------------------------------------------
def init_params(key, dv, da, dt, hidden, num_cat, alpha=0.4, beta=0.35):
    keys = jax.random.split(key, 9)

    def lin(k, fan_in, fan_out):
        bound = 1.0 / jnp.sqrt(fan_in)
        kw, kb = jax.random.split(k)
        w = jax.random.uniform(kw, (fan_in, fan_out), jnp.float32,
                               -bound, bound)
        b = jax.random.uniform(kb, (fan_out,), jnp.float32, -bound, bound)
        return w, b

    wv1, bv1 = lin(keys[0], dv, hidden)
    wv2, bv2 = lin(keys[1], hidden, num_cat)
    wa1, ba1 = lin(keys[2], da, hidden)
    wa2, ba2 = lin(keys[3], hidden, num_cat)
    wt1, bt1 = lin(keys[4], dt, hidden)
    wt2, bt2 = lin(keys[5], hidden, num_cat)

    def bn(kg):
        g = 1.0 + 0.01 * jax.random.normal(kg, (hidden,), jnp.float32)
        b = 0.01 * jax.random.normal(jax.random.fold_in(kg, 1),
                                     (hidden,), jnp.float32)
        rm = 0.1 * jax.random.normal(jax.random.fold_in(kg, 2),
                                     (hidden,), jnp.float32)
        rv = 1.0 + 0.1 * jax.random.uniform(jax.random.fold_in(kg, 3),
                                            (hidden,), jnp.float32)
        return g, b, rm, rv

    v_bn, a_bn, t_bn = bn(keys[6]), bn(keys[7]), bn(keys[8])

    return {
        "wv1": wv1, "bv1": bv1, "wv2": wv2, "bv2": bv2,
        "wa1": wa1, "ba1": ba1, "wa2": wa2, "ba2": ba2,
        "wt1": wt1, "bt1": bt1, "wt2": wt2, "bt2": bt2,
        "v_bn_g": v_bn[0], "v_bn_b": v_bn[1],
        "v_bn_rm": v_bn[2], "v_bn_rv": v_bn[3],
        "a_bn_g": a_bn[0], "a_bn_b": a_bn[1],
        "a_bn_rm": a_bn[2], "a_bn_rv": a_bn[3],
        "t_bn_g": t_bn[0], "t_bn_b": t_bn[1],
        "t_bn_rm": t_bn[2], "t_bn_rv": t_bn[3],
        "alpha": jnp.float32(alpha), "beta": jnp.float32(beta),
    }


if __name__ == "__main__":
    # Small shapes consistent with the module's forward:
    #   visual: (B, T, Dv), audio: (B, Da), text: (B, Dt)
    B, T = 8, 8
    Dv, Da, Dt = 128, 128, 64
    HIDDEN, NUM_CAT = 32, 16

    key = jax.random.PRNGKey(0)
    k_vis, k_aud, k_txt, k_par = jax.random.split(key, 4)

    visual = jax.random.normal(k_vis, (B, T, Dv), jnp.float32)
    audio = jax.random.normal(k_aud, (B, Da), jnp.float32)
    text = jax.random.normal(k_txt, (B, Dt), jnp.float32)
    # alpha=0.4, beta=0.35 so the text branch actually contributes to mm_out
    params = init_params(k_par, Dv, Da, Dt, HIDDEN, NUM_CAT)

    fwd = jax.jit(movieclip_forward)
    out = fwd(visual, audio, text, params)
    jax.block_until_ready(out)

    # (1) tight check vs a pure-JAX mirror of the exact fused bf16 math
    mv, ma, mt, mmm = mirror_reference(visual, audio, text, params)
    for got, want in [(out["visual_output"], mv), (out["audio_output"], ma),
                      (out["text_output"], mt), (out["multimodal_output"], mmm)]:
        assert jnp.allclose(got, want, atol=2e-3, rtol=2e-3), "mirror mismatch"

    # (2) semantics check vs the f32 PyTorch-eval reference (bf16 tolerance)
    rv_, ra_, rt_, rmm_ = reference_forward(visual, audio, text, params)
    for got, want in [(out["visual_output"], rv_), (out["audio_output"], ra_),
                      (out["text_output"], rt_), (out["multimodal_output"], rmm_)]:
        assert jnp.allclose(got, want, atol=3e-2, rtol=3e-2), "ref mismatch"

    print("KERNEL_OK")
</pallas_src>

<mosaic_0001>
module attributes {stable_mosaic.version = 11 : i64} {
  func.func @_movieclip_kernel(%arg0: i32, %arg1: memref<8x8x128xf32, #tpu.memory_space<vmem>>, %arg2: memref<8x128xf32, #tpu.memory_space<vmem>>, %arg3: memref<8x64xf32, #tpu.memory_space<vmem>>, %arg4: memref<128x128xbf16, #tpu.memory_space<vmem>>, %arg5: memref<128x128xbf16, #tpu.memory_space<vmem>>, %arg6: memref<64x128xbf16, #tpu.memory_space<vmem>>, %arg7: memref<1x128xf32, #tpu.memory_space<vmem>>, %arg8: memref<128x128xbf16, #tpu.memory_space<vmem>>, %arg9: memref<1x128xf32, #tpu.memory_space<vmem>>, %arg10: memref<8x128xf32, #tpu.memory_space<vmem>>) attributes {dimension_semantics = [#tpu.dimension_semantics<parallel>], iteration_bounds = array<i64: 1>, scalar_prefetch = 0 : i64, scratch_operands = 0 : i64, tpu.core_type = #tpu.core_type<tc>, window_params = [{transform_indices = @transform_0, window_bounds = array<i64: 8, 8, 128>}, {transform_indices = @transform_1, window_bounds = array<i64: 8, 128>}, {transform_indices = @transform_2, window_bounds = array<i64: 8, 64>}, {pipeline_mode = #tpu.pipeline_mode<synchronous>, transform_indices = @transform_3, window_bounds = array<i64: 128, 128>}, {pipeline_mode = #tpu.pipeline_mode<synchronous>, transform_indices = @transform_4, window_bounds = array<i64: 128, 128>}, {pipeline_mode = #tpu.pipeline_mode<synchronous>, transform_indices = @transform_5, window_bounds = array<i64: 64, 128>}, {pipeline_mode = #tpu.pipeline_mode<synchronous>, transform_indices = @transform_6, window_bounds = array<i64: 1, 128>}, {pipeline_mode = #tpu.pipeline_mode<synchronous>, transform_indices = @transform_7, window_bounds = array<i64: 128, 128>}, {pipeline_mode = #tpu.pipeline_mode<synchronous>, transform_indices = @transform_8, window_bounds = array<i64: 1, 128>}, {transform_indices = @transform_9, window_bounds = array<i64: 8, 128>}]} {
    %c0 = arith.constant 0 : index
    %c0_0 = arith.constant 0 : index
    %c0_1 = arith.constant 0 : index
    %0 = vector.load %arg1[%c0, %c0_0, %c0_1] : memref<8x8x128xf32, #tpu.memory_space<vmem>>, vector<8x8x128xf32>
    %c0_2 = arith.constant 0 : index
    %c0_3 = arith.constant 0 : index
    %1 = vector.load %arg2[%c0_2, %c0_3] : memref<8x128xf32, #tpu.memory_space<vmem>>, vector<8x128xf32>
    %c0_4 = arith.constant 0 : index
    %c0_5 = arith.constant 0 : index
    %2 = vector.load %arg3[%c0_4, %c0_5] : memref<8x64xf32, #tpu.memory_space<vmem>>, vector<8x64xf32>
    %c0_6 = arith.constant 0 : index
    %c0_7 = arith.constant 0 : index
    %3 = vector.load %arg4[%c0_6, %c0_7] : memref<128x128xbf16, #tpu.memory_space<vmem>>, vector<128x128xbf16>
    %c0_8 = arith.constant 0 : index
    %c0_9 = arith.constant 0 : index
    %4 = vector.load %arg5[%c0_8, %c0_9] : memref<128x128xbf16, #tpu.memory_space<vmem>>, vector<128x128xbf16>
    %c0_10 = arith.constant 0 : index
    %c0_11 = arith.constant 0 : index
    %5 = vector.load %arg6[%c0_10, %c0_11] : memref<64x128xbf16, #tpu.memory_space<vmem>>, vector<64x128xbf16>
    %c0_12 = arith.constant 0 : index
    %c0_13 = arith.constant 0 : index
    %6 = vector.load %arg7[%c0_12, %c0_13] : memref<1x128xf32, #tpu.memory_space<vmem>>, vector<1x128xf32>
    %c0_14 = arith.constant 0 : index
    %c0_15 = arith.constant 0 : index
    %7 = vector.load %arg8[%c0_14, %c0_15] : memref<128x128xbf16, #tpu.memory_space<vmem>>, vector<128x128xbf16>
    %c0_16 = arith.constant 0 : index
    %c0_17 = arith.constant 0 : index
    %8 = vector.load %arg9[%c0_16, %c0_17] : memref<1x128xf32, #tpu.memory_space<vmem>>, vector<1x128xf32>
    %cst = arith.constant dense<0.000000e+00> : vector<8x128xf32>
    %9 = vector.multi_reduction <add>, %0, %cst [1] : vector<8x8x128xf32> to vector<8x128xf32>
    %10 = arith.truncf %9 : vector<8x128xf32> to vector<8x128xbf16>
    %cst_18 = arith.constant dense<0.000000e+00> : vector<8x128xf32>
    %11 = tpu.matmul %10, %3, %cst_18 {dimension_numbers = #tpu.dot_dimension_numbers<[1], [0], [0], [1], [0, 0, 1, 1], [], []>} : vector<8x128xbf16>, vector<128x128xbf16>, vector<8x128xf32> -> vector<8x128xf32>
    %12 = arith.truncf %1 : vector<8x128xf32> to vector<8x128xbf16>
    %cst_19 = arith.constant dense<0.000000e+00> : vector<8x128xf32>
    %13 = tpu.matmul %12, %4, %cst_19 {dimension_numbers = #tpu.dot_dimension_numbers<[1], [0], [0], [1], [0, 0, 1, 1], [], []>} : vector<8x128xbf16>, vector<128x128xbf16>, vector<8x128xf32> -> vector<8x128xf32>
    %14 = arith.addf %11, %13 : vector<8x128xf32>
    %15 = arith.truncf %2 : vector<8x64xf32> to vector<8x64xbf16>
    %cst_20 = arith.constant dense<0.000000e+00> : vector<8x128xf32>
    %16 = tpu.matmul %15, %5, %cst_20 {dimension_numbers = #tpu.dot_dimension_numbers<[1], [0], [0], [1], [0, 0, 1, 1], [], []>} : vector<8x64xbf16>, vector<64x128xbf16>, vector<8x128xf32> -> vector<8x128xf32>
    %17 = arith.addf %14, %16 : vector<8x128xf32>
    %18 = vector.broadcast %6 : vector<1x128xf32> to vector<8x128xf32>
    %19 = arith.addf %17, %18 : vector<8x128xf32>
    %cst_21 = arith.constant 0.000000e+00 : f32
    %20 = vector.broadcast %cst_21 : f32 to vector<8x128xf32>
    %21 = arith.maximumf %19, %20 : vector<8x128xf32>
    %22 = arith.truncf %21 : vector<8x128xf32> to vector<8x128xbf16>
    %cst_22 = arith.constant dense<0.000000e+00> : vector<8x128xf32>
    %23 = tpu.matmul %22, %7, %cst_22 {dimension_numbers = #tpu.dot_dimension_numbers<[1], [0], [0], [1], [0, 0, 1, 1], [], []>} : vector<8x128xbf16>, vector<128x128xbf16>, vector<8x128xf32> -> vector<8x128xf32>
    %24 = vector.broadcast %8 : vector<1x128xf32> to vector<8x128xf32>
    %25 = arith.addf %23, %24 : vector<8x128xf32>
    %c0_23 = arith.constant 0 : index
    %c0_24 = arith.constant 0 : index
    %26 = vector.load %arg10[%c0_23, %c0_24] : memref<8x128xf32, #tpu.memory_space<vmem>>, vector<8x128xf32>
    tpu.vector_store %arg10[%c0_23, %c0_24], %25 {strides = array<i32>} : memref<8x128xf32, #tpu.memory_space<vmem>>, vector<8x128xf32>,
    return
  }
  func.func @transform_0(%arg0: i32) -> (i32, i32, i32) {
    %c0_i32 = arith.constant 0 : i32
    %c0_i32_0 = arith.constant 0 : i32
    %c0_i32_1 = arith.constant 0 : i32
    return %arg0, %c0_i32, %c0_i32_0 : i32, i32, i32
  }
  func.func @transform_1(%arg0: i32) -> (i32, i32) {
    %c0_i32 = arith.constant 0 : i32
    %c0_i32_0 = arith.constant 0 : i32
    return %arg0, %c0_i32 : i32, i32
  }
  func.func @transform_2(%arg0: i32) -> (i32, i32) {
    %c0_i32 = arith.constant 0 : i32
    %c0_i32_0 = arith.constant 0 : i32
    return %arg0, %c0_i32 : i32, i32
  }
  func.func @transform_3(%arg0: i32) -> (i32, i32) {
    %c0_i32 = arith.constant 0 : i32
    %c0_i32_0 = arith.constant 0 : i32
    %c0_i32_1 = arith.constant 0 : i32
    return %c0_i32, %c0_i32_0 : i32, i32
  }
  func.func @transform_4(%arg0: i32) -> (i32, i32) {
    %c0_i32 = arith.constant 0 : i32
    %c0_i32_0 = arith.constant 0 : i32
    %c0_i32_1 = arith.constant 0 : i32
    return %c0_i32, %c0_i32_0 : i32, i32
  }
  func.func @transform_5(%arg0: i32) -> (i32, i32) {
    %c0_i32 = arith.constant 0 : i32
    %c0_i32_0 = arith.constant 0 : i32
    %c0_i32_1 = arith.constant 0 : i32
    return %c0_i32, %c0_i32_0 : i32, i32
  }
  func.func @transform_6(%arg0: i32) -> (i32, i32) {
    %c0_i32 = arith.constant 0 : i32
    %c0_i32_0 = arith.constant 0 : i32
    %c0_i32_1 = arith.constant 0 : i32
    return %c0_i32, %c0_i32_0 : i32, i32
  }
  func.func @transform_7(%arg0: i32) -> (i32, i32) {
    %c0_i32 = arith.constant 0 : i32
    %c0_i32_0 = arith.constant 0 : i32
    %c0_i32_1 = arith.constant 0 : i32
    return %c0_i32, %c0_i32_0 : i32, i32
  }
  func.func @transform_8(%arg0: i32) -> (i32, i32) {
    %c0_i32 = arith.constant 0 : i32
    %c0_i32_0 = arith.constant 0 : i32
    %c0_i32_1 = arith.constant 0 : i32
    return %c0_i32, %c0_i32_0 : i32, i32
  }
  func.func @transform_9(%arg0: i32) -> (i32, i32) {
    %c0_i32 = arith.constant 0 : i32
    %c0_i32_0 = arith.constant 0 : i32
    return %arg0, %c0_i32 : i32, i32
  }
}

</mosaic_0001>

<llo_original>
// kernel: movieclip_forward.1
$region0: #{movieclip_forward.1}
  #allocation0 [shape = 'u32[]', space=smem, size = 0x4, offset = 0x4, fixed_abs, tag = 'smem constant byte address 0x4 - core index']
  #allocation1 [shape = 'u32[144,128]{1,0:T(1,128)}', space=vmem, size = 0x12000, scoped, tag = 'internal scratch']
  %s0 = inlined_call_operand.vmem [shape: f32[8,8,128], index: 0, kind: input, shape index: {}]
  %s1 = inlined_call_operand.vmem [shape: f32[8,128], index: 1, kind: input, shape index: {}]
  %s2 = inlined_call_operand.vmem [shape: f32[8,64], index: 2, kind: input, shape index: {}]
  %s3 = inlined_call_operand.vmem [shape: bf16[128,128], index: 3, kind: input, shape index: {}]
  %s4 = inlined_call_operand.vmem [shape: bf16[128,128], index: 4, kind: input, shape index: {}]
  %s5 = inlined_call_operand.vmem [shape: bf16[64,128], index: 5, kind: input, shape index: {}]
  %s6 = inlined_call_operand.vmem [shape: f32[1,128], index: 6, kind: input, shape index: {}]
  %s7 = inlined_call_operand.vmem [shape: bf16[128,128], index: 7, kind: input, shape index: {}]
  %s8 = inlined_call_operand.vmem [shape: f32[1,128], index: 8, kind: input, shape index: {}]
  %s9 = inlined_call_operand.vmem [shape: f32[8,128], index: 9, kind: output, shape index: {}]
  %s10 = sld [smem:[#allocation0]]
  $region46: #{movieclip_forward.1} parent=0
    _
  %s12 = ssub.s32 1, %s10
  %s13 = scalar_select 0, %s12, %s10
  // Predicated region
  $region2: #{movieclip_forward.1} parent=0 // pred_check
    _
  $region3: #{movieclip_forward.1} parent=0 // pred_check_branch
    %15 = sbr.rel (0) target = $region5
  $region4: #{movieclip_forward.1} parent=0 // pred_region
    _
  $region5: #{movieclip_forward.1} parent=0 // pred_fallthru
    _
  // Predicated region
  $region6: #{movieclip_forward.1} parent=0 // pred_check
    _
  $region7: #{movieclip_forward.1} parent=0 // pred_check_branch
    %17 = sbr.rel (0) target = $region9
  $region8: #{movieclip_forward.1} parent=0 // pred_region
    _
  $region9: #{movieclip_forward.1} parent=0 // pred_fallthru
    _
  // Predicated region
  $region10: #{movieclip_forward.1} parent=0 // pred_check
    _
  $region11: #{movieclip_forward.1} parent=0 // pred_check_branch
    %19 = sbr.rel (0) target = $region13
  $region12: #{movieclip_forward.1} parent=0 // pred_region
    _
  $region13: #{movieclip_forward.1} parent=0 // pred_fallthru
    _
  // Predicated region
  $region14: #{movieclip_forward.1} parent=0 // pred_check
    _
  $region15: #{movieclip_forward.1} parent=0 // pred_check_branch
    %21 = sbr.rel (0) target = $region17
  $region16: #{movieclip_forward.1} parent=0 // pred_region
    _
  $region17: #{movieclip_forward.1} parent=0 // pred_fallthru
    _
  // Predicated region
  $region18: #{movieclip_forward.1} parent=0 // pred_check
    _
  $region19: #{movieclip_forward.1} parent=0 // pred_check_branch
    %23 = sbr.rel (0) target = $region21
  $region20: #{movieclip_forward.1} parent=0 // pred_region
    _
  $region21: #{movieclip_forward.1} parent=0 // pred_fallthru
    _
  // Predicated region
  $region22: #{movieclip_forward.1} parent=0 // pred_check
    _
  $region23: #{movieclip_forward.1} parent=0 // pred_check_branch
    %25 = sbr.rel (0) target = $region25
  $region24: #{movieclip_forward.1} parent=0 // pred_region
    _
  $region25: #{movieclip_forward.1} parent=0 // pred_fallthru
    _
  // Predicated region
  $region26: #{movieclip_forward.1} parent=0 // pred_check
    _
  $region27: #{movieclip_forward.1} parent=0 // pred_check_branch
    %27 = sbr.rel (0) target = $region29
  $region28: #{movieclip_forward.1} parent=0 // pred_region
    _
  $region29: #{movieclip_forward.1} parent=0 // pred_fallthru
    _
  // Predicated region
  $region30: #{movieclip_forward.1} parent=0 // pred_check
    _
  $region31: #{movieclip_forward.1} parent=0 // pred_check_branch
    %29 = sbr.rel (0) target = $region33
  $region32: #{movieclip_forward.1} parent=0 // pred_region
    _
  $region33: #{movieclip_forward.1} parent=0 // pred_fallthru
    _
  // Predicated region
  $region34: #{movieclip_forward.1} parent=0 // pred_check
    _
  $region35: #{movieclip_forward.1} parent=0 // pred_check_branch
    %31 = sbr.rel (0) target = $region37
  $region36: #{movieclip_forward.1} parent=0 // pred_region
    _
  $region37: #{movieclip_forward.1} parent=0 // pred_fallthru
    _
  %v33 = vld [vmem:[%s0] sm:$0xff]
  %v34 = vld [vmem:[%s0 + $0x8] sm:$0xff]
  %v35 = vld [vmem:[%s0 + $0x10] sm:$0xff]
  %v36 = vld [vmem:[%s0 + $0x18] sm:$0xff]
  %v37 = vld [vmem:[%s0 + $0x20] sm:$0xff]
  %v38 = vld [vmem:[%s0 + $0x28] sm:$0xff]
  %v39 = vld [vmem:[%s0 + $0x30] sm:$0xff]
  %v40 = vld [vmem:[%s0 + $0x38] sm:$0xff]
  %v41 = vld [vmem:[%s1] sm:$0xff]
  %v42 = vld [vmem:[%s2] sm:$0xff]
  %v43 = vld [vmem:[%s3] sm:$0xf]
  %v44 = vld [vmem:[%s3 + $0x4] sm:$0xf]
  %v45 = vld [vmem:[%s3 + $0x8] sm:$0xf]
  %v46 = vld [vmem:[%s3 + $0xc] sm:$0xf]
  %v47 = vld [vmem:[%s3 + $0x10] sm:$0xf]
  %v48 = vld [vmem:[%s3 + $0x14] sm:$0xf]
  %v49 = vld [vmem:[%s3 + $0x18] sm:$0xf]
  %v50 = vld [vmem:[%s3 + $0x1c] sm:$0xf]
  %v51 = vld [vmem:[%s3 + $0x20] sm:$0xf]
  %v52 = vld [vmem:[%s3 + $0x24] sm:$0xf]
  %v53 = vld [vmem:[%s3 + $0x28] sm:$0xf]
  %v54 = vld [vmem:[%s3 + $0x2c] sm:$0xf]
  %v55 = vld [vmem:[%s3 + $0x30] sm:$0xf]
  %v56 = vld [vmem:[%s3 + $0x34] sm:$0xf]
  %v57 = vld [vmem:[%s3 + $0x38] sm:$0xf]
  %v58 = vld [vmem:[%s3 + $0x3c] sm:$0xf]
  %v59 = vld [vmem:[%s4] sm:$0xf]
  %v60 = vld [vmem:[%s4 + $0x4] sm:$0xf]
  %v61 = vld [vmem:[%s4 + $0x8] sm:$0xf]
  %v62 = vld [vmem:[%s4 + $0xc] sm:$0xf]
  %v63 = vld [vmem:[%s4 + $0x10] sm:$0xf]
  %v64 = vld [vmem:[%s4 + $0x14] sm:$0xf]
  %v65 = vld [vmem:[%s4 + $0x18] sm:$0xf]
  %v66 = vld [vmem:[%s4 + $0x1c] sm:$0xf]
  %v67 = vld [vmem:[%s4 + $0x20] sm:$0xf]
  %v68 = vld [vmem:[%s4 + $0x24] sm:$0xf]
  %v69 = vld [vmem:[%s4 + $0x28] sm:$0xf]
  %v70 = vld [vmem:[%s4 + $0x2c] sm:$0xf]
  %v71 = vld [vmem:[%s4 + $0x30] sm:$0xf]
  %v72 = vld [vmem:[%s4 + $0x34] sm:$0xf]
  %v73 = vld [vmem:[%s4 + $0x38] sm:$0xf]
  %v74 = vld [vmem:[%s4 + $0x3c] sm:$0xf]
  %v75 = vld [vmem:[%s5] sm:$0xf]
  %v76 = vld [vmem:[%s5 + $0x4] sm:$0xf]
  %v77 = vld [vmem:[%s5 + $0x8] sm:$0xf]
  %v78 = vld [vmem:[%s5 + $0xc] sm:$0xf]
  %v79 = vld [vmem:[%s5 + $0x10] sm:$0xf]
  %v80 = vld [vmem:[%s5 + $0x14] sm:$0xf]
  %v81 = vld [vmem:[%s5 + $0x18] sm:$0xf]
  %v82 = vld [vmem:[%s5 + $0x1c] sm:$0xf]
  %v83 = vld [vmem:[%s6] sm:$0x1]
  %v84 = vld [vmem:[%s7] sm:$0xf]
  %v85 = vld [vmem:[%s7 + $0x4] sm:$0xf]
  %v86 = vld [vmem:[%s7 + $0x8] sm:$0xf]
  %v87 = vld [vmem:[%s7 + $0xc] sm:$0xf]
  %v88 = vld [vmem:[%s7 + $0x10] sm:$0xf]
  %v89 = vld [vmem:[%s7 + $0x14] sm:$0xf]
  %v90 = vld [vmem:[%s7 + $0x18] sm:$0xf]
  %v91 = vld [vmem:[%s7 + $0x1c] sm:$0xf]
  %v92 = vld [vmem:[%s7 + $0x20] sm:$0xf]
  %v93 = vld [vmem:[%s7 + $0x24] sm:$0xf]
  %v94 = vld [vmem:[%s7 + $0x28] sm:$0xf]
  %v95 = vld [vmem:[%s7 + $0x2c] sm:$0xf]
  %v96 = vld [vmem:[%s7 + $0x30] sm:$0xf]
  %v97 = vld [vmem:[%s7 + $0x34] sm:$0xf]
  %v98 = vld [vmem:[%s7 + $0x38] sm:$0xf]
  %v99 = vld [vmem:[%s7 + $0x3c] sm:$0xf]
  %v100 = vld [vmem:[%s8] sm:$0x1]
  %v101 = vrot.slane %v33, 4
  %v102 = vadd.f32 %v33, %v101
  %v103 = vrot.slane %v102, 2
  %v104 = vadd.f32 %v102, %v103
  %v105 = vrot.slane %v104, 1
  %v106 = vadd.f32 %v104, %v105
  %v107 = vrot.slane %v34, 4
  %v108 = vadd.f32 %v34, %v107
  %v109 = vrot.slane %v108, 2
  %v110 = vadd.f32 %v108, %v109
  %v111 = vrot.slane %v110, 1
  %v112 = vadd.f32 %v110, %v111
  %v113 = vrot.slane %v35, 4
  %v114 = vadd.f32 %v35, %v113
  %v115 = vrot.slane %v114, 2
  %v116 = vadd.f32 %v114, %v115
  %v117 = vrot.slane %v116, 1
  %v118 = vadd.f32 %v116, %v117
  %v119 = vrot.slane %v36, 4
  %v120 = vadd.f32 %v36, %v119
  %v121 = vrot.slane %v120, 2
  %v122 = vadd.f32 %v120, %v121
  %v123 = vrot.slane %v122, 1
  %v124 = vadd.f32 %v122, %v123
  %v125 = vrot.slane %v37, 4
  %v126 = vadd.f32 %v37, %v125
  %v127 = vrot.slane %v126, 2
  %v128 = vadd.f32 %v126, %v127
  %v129 = vrot.slane %v128, 1
  %v130 = vadd.f32 %v128, %v129
  %v131 = vrot.slane %v38, 4
  %v132 = vadd.f32 %v38, %v131
  %v133 = vrot.slane %v132, 2
  %v134 = vadd.f32 %v132, %v133
  %v135 = vrot.slane %v134, 1
  %v136 = vadd.f32 %v134, %v135
  %v137 = vrot.slane %v39, 4
  %v138 = vadd.f32 %v39, %v137
  %v139 = vrot.slane %v138, 2
  %v140 = vadd.f32 %v138, %v139
  %v141 = vrot.slane %v140, 1
  %v142 = vadd.f32 %v140, %v141
  %v143 = vrot.slane %v40, 4
  %v144 = vadd.f32 %v40, %v143
  %v145 = vrot.slane %v144, 2
  %v146 = vadd.f32 %v144, %v145
  %v147 = vrot.slane %v146, 1
  %v148 = vadd.f32 %v146, %v147
  %v149 = vpack.c.bf16 %v106, %v106
  %v150 = vpack.c.bf16 %v112, %v112
  %v151 = vpack.c.bf16 %v118, %v118
  %v152 = vpack.c.bf16 %v124, %v124
  %v153 = vpack.c.bf16 %v130, %v130
  %v154 = vpack.c.bf16 %v136, %v136
  %v155 = vpack.c.bf16 %v142, %v142
  %v156 = vpack.c.bf16 %v148, %v148
  %v157 = vpack.c.bf16 %v41, %v41
  %v174 = vunpack.c.l.b16 %v59
  %v175 = vunpack.c.l.b16 %v60
  %v176 = vunpack.c.l.b16 %v61
  %v177 = vunpack.c.l.b16 %v62
  %v178 = vunpack.c.l.b16 %v63
  %v179 = vunpack.c.l.b16 %v64
  %v180 = vunpack.c.l.b16 %v65
  %v181 = vunpack.c.l.b16 %v66
  %v182 = vunpack.c.l.b16 %v67
  %v183 = vunpack.c.l.b16 %v68
  %v184 = vunpack.c.l.b16 %v69
  %v185 = vunpack.c.l.b16 %v70
  %v186 = vunpack.c.l.b16 %v71
  %v187 = vunpack.c.l.b16 %v72
  %v188 = vunpack.c.l.b16 %v73
  %v189 = vunpack.c.l.b16 %v74
  %v190 = vpack.c.b16 %v175, %v174
  %v191 = vpack.c.b16 %v177, %v176
  %v192 = vpack.c.b16 %v179, %v178
  %v193 = vpack.c.b16 %v181, %v180
  %v194 = vpack.c.b16 %v183, %v182
  %v195 = vpack.c.b16 %v185, %v184
  %v196 = vpack.c.b16 %v187, %v186
  %v197 = vpack.c.b16 %v189, %v188
  %206 = vmatprep.subr.bf16.mxu0 0
  %207 = vmatpush1.bf16.msra.mxu0 %v190
  %208 = vmatprep.subr.bf16.mxu0 0
  %209 = vmatpush1.bf16.msra.mxu0 %v191
  %210 = vmatprep.subr.bf16.mxu0 0
  %211 = vmatpush1.bf16.msra.mxu0 %v192
  %212 = vmatprep.subr.bf16.mxu0 0
  %213 = vmatpush1.bf16.msra.mxu0 %v193
  %214 = vmatprep.subr.bf16.mxu0 0
  %215 = vmatpush1.bf16.msra.mxu0 %v194
  %216 = vmatprep.subr.bf16.mxu0 0
  %217 = vmatpush1.bf16.msra.mxu0 %v195
  %218 = vmatprep.subr.bf16.mxu0 0
  %219 = vmatpush1.bf16.msra.mxu0 %v196
  %220 = vmatprep.subr.bf16.mxu0 0
  %221 = vmatpush1.bf16.msra.mxu0 %v197
  %222 = vmatprep.subr.bf16.mxu0 0
  %223 = vmatpush1.bf16.msra.mxu0 0
  %224 = vmatprep.subr.bf16.mxu0 0
  %225 = vmatpush1.bf16.msra.mxu0 0
  %226 = vmatprep.subr.bf16.mxu0 0
  %227 = vmatpush1.bf16.msra.mxu0 0
  %228 = vmatprep.subr.bf16.mxu0 0
  %229 = vmatpush1.bf16.msra.mxu0 0
  %230 = vmatprep.subr.bf16.mxu0 0
  %231 = vmatpush1.bf16.msra.mxu0 0
  %232 = vmatprep.subr.bf16.mxu0 0
  %233 = vmatpush1.bf16.msra.mxu0 0
  %234 = vmatprep.subr.bf16.mxu0 0
  %235 = vmatpush1.bf16.msra.mxu0 0
  %236 = vmatprep.subr.bf16.mxu0 0
  %237 = vmatpush1.bf16.msra.mxu0 0
  %238 = vmatprep.mubr.bf16.mxu0 0
  %239 = vmatmul.mubr.bf16.gmra.mrb[0].mxu0 %v157
  %v240 = vpop.f32.mrb[0].mxu0
  %v241 = vadd.f32 0.0, %v240
  %v242 = vpop.f32.mrb[0].mxu0
  %v243 = vpop.f32.mrb[0].mxu0
  %v244 = vpop.f32.mrb[0].mxu0
  %245 = vdwg.mxu0
  %v254 = vunpack.c.l.b16 %v149
  %v255 = vunpack.c.l.b16 %v150
  %v256 = vunpack.c.l.b16 %v151
  %v257 = vunpack.c.l.b16 %v152
  %v258 = vunpack.c.l.b16 %v153
  %v259 = vunpack.c.l.b16 %v154
  %v260 = vunpack.c.l.b16 %v155
  %v261 = vunpack.c.l.b16 %v156
  %vm262 = vcmask 1041409
  %v263 = vsel %vm262, %v255, %v254
  %vm264 = vcmask 1042434
  %v265 = vsel %vm264, %v256, %v263
  %vm266 = vcmask 1043459
  %v267 = vsel %vm266, %v257, %v265
  %vm268 = vcmask 1044484
  %v269 = vsel %vm268, %v258, %v267
  %vm270 = vcmask 1045509
  %v271 = vsel %vm270, %v259, %v269
  %vm272 = vcmask 1046534
  %v273 = vsel %vm272, %v260, %v271
  %vm274 = vcmask 1047559
  %v275 = vsel %vm274, %v261, %v273
  %v276 = vpack.c.b16 %v275, %v275
  %v294 = vunpack.c.l.b16 %v43
  %v295 = vunpack.c.l.b16 %v44
  %v296 = vunpack.c.l.b16 %v45
  %v297 = vunpack.c.l.b16 %v46
  %v298 = vunpack.c.l.b16 %v47
  %v299 = vunpack.c.l.b16 %v48
  %v300 = vunpack.c.l.b16 %v49
  %v301 = vunpack.c.l.b16 %v50
  %v302 = vunpack.c.l.b16 %v51
  %v303 = vunpack.c.l.b16 %v52
  %v304 = vunpack.c.l.b16 %v53
  %v305 = vunpack.c.l.b16 %v54
  %v306 = vunpack.c.l.b16 %v55
  %v307 = vunpack.c.l.b16 %v56
  %v308 = vunpack.c.l.b16 %v57
  %v309 = vunpack.c.l.b16 %v58
  %v310 = vpack.c.b16 %v295, %v294
  %v311 = vpack.c.b16 %v297, %v296
  %v312 = vpack.c.b16 %v299, %v298
  %v313 = vpack.c.b16 %v301, %v300
  %v314 = vpack.c.b16 %v303, %v302
  %v315 = vpack.c.b16 %v305, %v304
  %v316 = vpack.c.b16 %v307, %v306
  %v317 = vpack.c.b16 %v309, %v308
  %326 = vmatprep.subr.bf16.mxu0 0
  %327 = vmatpush1.bf16.msra.mxu0 %v310
  %328 = vmatprep.subr.bf16.mxu0 0
  %329 = vmatpush1.bf16.msra.mxu0 %v311
  %330 = vmatprep.subr.bf16.mxu0 0
  %331 = vmatpush1.bf16.msra.mxu0 %v312
  %332 = vmatprep.subr.bf16.mxu0 0
  %333 = vmatpush1.bf16.msra.mxu0 %v313
  %334 = vmatprep.subr.bf16.mxu0 0
  %335 = vmatpush1.bf16.msra.mxu0 %v314
  %336 = vmatprep.subr.bf16.mxu0 0
  %337 = vmatpush1.bf16.msra.mxu0 %v315
  %338 = vmatprep.subr.bf16.mxu0 0
  %339 = vmatpush1.bf16.msra.mxu0 %v316
  %340 = vmatprep.subr.bf16.mxu0 0
  %341 = vmatpush1.bf16.msra.mxu0 %v317
  %342 = vmatprep.subr.bf16.mxu0 0
  %343 = vmatpush1.bf16.msra.mxu0 0
  %344 = vmatprep.subr.bf16.mxu0 0
  %345 = vmatpush1.bf16.msra.mxu0 0
  %346 = vmatprep.subr.bf16.mxu0 0
  %347 = vmatpush1.bf16.msra.mxu0 0
  %348 = vmatprep.subr.bf16.mxu0 0
  %349 = vmatpush1.bf16.msra.mxu0 0
  %350 = vmatprep.subr.bf16.mxu0 0
  %351 = vmatpush1.bf16.msra.mxu0 0
  %352 = vmatprep.subr.bf16.mxu0 0
  %353 = vmatpush1.bf16.msra.mxu0 0
  %354 = vmatprep.subr.bf16.mxu0 0
  %355 = vmatpush1.bf16.msra.mxu0 0
  %356 = vmatprep.subr.bf16.mxu0 0
  %357 = vmatpush1.bf16.msra.mxu0 0
  %358 = vmatprep.mubr.bf16.mxu0 0
  %359 = vmatmul.mubr.bf16.gmra.mrb[0].mxu0 %v276
  %v360 = vpop.f32.mrb[0].mxu0
  %v361 = vadd.f32 %v241, %v360
  %v362 = vpop.f32.mrb[0].mxu0
  %v363 = vpop.f32.mrb[0].mxu0
  %v364 = vpop.f32.mrb[0].mxu0
  %365 = vdwg.mxu0
  %v366 = vpack.c.bf16 %v42, %v42
  %v375 = vunpack.c.l.b16 %v75
  %v376 = vunpack.c.l.b16 %v76
  %v377 = vunpack.c.l.b16 %v77
  %v378 = vunpack.c.l.b16 %v78
  %v379 = vunpack.c.l.b16 %v79
  %v380 = vunpack.c.l.b16 %v80
  %v381 = vunpack.c.l.b16 %v81
  %v382 = vunpack.c.l.b16 %v82
  %v383 = vpack.c.b16 %v376, %v375
  %v384 = vpack.c.b16 %v378, %v377
  %v385 = vpack.c.b16 %v380, %v379
  %v386 = vpack.c.b16 %v382, %v381
  %vm391 = vcmask 523264
  %v393 = vsel %vm391, %v366, 0
  %395 = vmatprep.subr.bf16.mxu0 0
  %396 = vmatpush1.bf16.msra.mxu0 %v383
  %397 = vmatprep.subr.bf16.mxu0 0
  %398 = vmatpush1.bf16.msra.mxu0 %v384
  %399 = vmatprep.subr.bf16.mxu0 0
  %400 = vmatpush1.bf16.msra.mxu0 %v385
  %401 = vmatprep.subr.bf16.mxu0 0
  %402 = vmatpush1.bf16.msra.mxu0 %v386
  %403 = vmatprep.subr.bf16.mxu0 0
  %404 = vmatpush1.bf16.msra.mxu0 0
  %405 = vmatprep.subr.bf16.mxu0 0
  %406 = vmatpush1.bf16.msra.mxu0 0
  %407 = vmatprep.subr.bf16.mxu0 0
  %408 = vmatpush1.bf16.msra.mxu0 0
  %409 = vmatprep.subr.bf16.mxu0 0
  %410 = vmatpush1.bf16.msra.mxu0 0
  %411 = vmatprep.subr.bf16.mxu0 0
  %412 = vmatpush1.bf16.msra.mxu0 0
  %413 = vmatprep.subr.bf16.mxu0 0
  %414 = vmatpush1.bf16.msra.mxu0 0
  %415 = vmatprep.subr.bf16.mxu0 0
  %416 = vmatpush1.bf16.msra.mxu0 0
  %417 = vmatprep.subr.bf16.mxu0 0
  %418 = vmatpush1.bf16.msra.mxu0 0
  %419 = vmatprep.subr.bf16.mxu0 0
  %420 = vmatpush1.bf16.msra.mxu0 0
  %421 = vmatprep.subr.bf16.mxu0 0
  %422 = vmatpush1.bf16.msra.mxu0 0
  %423 = vmatprep.subr.bf16.mxu0 0
  %424 = vmatpush1.bf16.msra.mxu0 0
  %425 = vmatprep.subr.bf16.mxu0 0
  %426 = vmatpush1.bf16.msra.mxu0 0
  %427 = vmatprep.mubr.bf16.mxu0 0
  %428 = vmatmul.mubr.bf16.gmra.mrb[0].mxu0 %v393
  %v429 = vpop.f32.mrb[0].mxu0
  %v430 = vadd.f32 0.0, %v429
  %v431 = vpop.f32.mrb[0].mxu0
  %v432 = vpop.f32.mrb[0].mxu0
  %v433 = vpop.f32.mrb[0].mxu0
  %434 = vdwg.mxu0
  %v435 = vadd.f32 %v361, %v430
  %v437 = vlaneseq
  %v438 = vshrl.u32 %v437, 7
  %v439 = vsub.s32 0, %v438
  %v440 = vrot.slane %v83, %v439
  %v442 = vadd.f32 %v435, %v440
  %v443 = vmax.f32 %v442, 0.0
  %v444 = vpack.c.bf16 %v443, %v443
  %v446 = vlaneseq
  %v447 = vshrl.u32 %v446, 7
  %v448 = vsub.s32 0, %v447
  %v449 = vrot.slane %v100, %v448
  %v467 = vunpack.c.l.b16 %v84
  %v468 = vunpack.c.l.b16 %v85
  %v469 = vunpack.c.l.b16 %v86
  %v470 = vunpack.c.l.b16 %v87
  %v471 = vunpack.c.l.b16 %v88
  %v472 = vunpack.c.l.b16 %v89
  %v473 = vunpack.c.l.b16 %v90
  %v474 = vunpack.c.l.b16 %v91
  %v475 = vunpack.c.l.b16 %v92
  %v476 = vunpack.c.l.b16 %v93
  %v477 = vunpack.c.l.b16 %v94
  %v478 = vunpack.c.l.b16 %v95
  %v479 = vunpack.c.l.b16 %v96
  %v480 = vunpack.c.l.b16 %v97
  %v481 = vunpack.c.l.b16 %v98
  %v482 = vunpack.c.l.b16 %v99
  %v483 = vpack.c.b16 %v468, %v467
  %v484 = vpack.c.b16 %v470, %v469
  %v485 = vpack.c.b16 %v472, %v471
  %v486 = vpack.c.b16 %v474, %v473
  %v487 = vpack.c.b16 %v476, %v475
  %v488 = vpack.c.b16 %v478, %v477
  %v489 = vpack.c.b16 %v480, %v479
  %v490 = vpack.c.b16 %v482, %v481
  %499 = vmatprep.subr.bf16.mxu0 0
  %500 = vmatpush1.bf16.msra.mxu0 %v483
  %501 = vmatprep.subr.bf16.mxu0 0
  %502 = vmatpush1.bf16.msra.mxu0 %v484
  %503 = vmatprep.subr.bf16.mxu0 0
  %504 = vmatpush1.bf16.msra.mxu0 %v485
  %505 = vmatprep.subr.bf16.mxu0 0
  %506 = vmatpush1.bf16.msra.mxu0 %v486
  %507 = vmatprep.subr.bf16.mxu0 0
  %508 = vmatpush1.bf16.msra.mxu0 %v487
  %509 = vmatprep.subr.bf16.mxu0 0
  %510 = vmatpush1.bf16.msra.mxu0 %v488
  %511 = vmatprep.subr.bf16.mxu0 0
  %512 = vmatpush1.bf16.msra.mxu0 %v489
  %513 = vmatprep.subr.bf16.mxu0 0
  %514 = vmatpush1.bf16.msra.mxu0 %v490
  %515 = vmatprep.subr.bf16.mxu0 0
  %516 = vmatpush1.bf16.msra.mxu0 0
  %517 = vmatprep.subr.bf16.mxu0 0
  %518 = vmatpush1.bf16.msra.mxu0 0
  %519 = vmatprep.subr.bf16.mxu0 0
  %520 = vmatpush1.bf16.msra.mxu0 0
  %521 = vmatprep.subr.bf16.mxu0 0
  %522 = vmatpush1.bf16.msra.mxu0 0
  %523 = vmatprep.subr.bf16.mxu0 0
  %524 = vmatpush1.bf16.msra.mxu0 0
  %525 = vmatprep.subr.bf16.mxu0 0
  %526 = vmatpush1.bf16.msra.mxu0 0
  %527 = vmatprep.subr.bf16.mxu0 0
  %528 = vmatpush1.bf16.msra.mxu0 0
  %529 = vmatprep.subr.bf16.mxu0 0
  %530 = vmatpush1.bf16.msra.mxu0 0
  %531 = vmatprep.mubr.bf16.mxu0 0
  %532 = vmatmul.mubr.bf16.gmra.mrb[0].mxu0 %v444
  %v533 = vpop.f32.mrb[0].mxu0
  %v534 = vadd.f32 %v449, %v533
  %v535 = vpop.f32.mrb[0].mxu0
  %v536 = vpop.f32.mrb[0].mxu0
  %v537 = vpop.f32.mrb[0].mxu0
  %538 = vdwg.mxu0
  %539 = vst [vmem:[%s9] sm:$0xff] %v534
  // Predicated region
  $region38: #{movieclip_forward.1} parent=0 // pred_check
    _
  $region39: #{movieclip_forward.1} parent=0 // pred_check_branch
    %541 = sbr.rel (0) target = $region41
  $region40: #{movieclip_forward.1} parent=0 // pred_region
    _
  $region41: #{movieclip_forward.1} parent=0 // pred_fallthru
    _
  // Predicated region
  $region42: #{movieclip_forward.1} parent=0 // pred_check
    _
  $region43: #{movieclip_forward.1} parent=0 // pred_check_branch
    %543 = sbr.rel (0) target = $region45
  $region44: #{movieclip_forward.1} parent=0 // pred_region
    _
  $region45: #{movieclip_forward.1} parent=0 // pred_fallthru
    _

</llo_original>
